<compile_context>
chip_gen: v7x
topology: tpu7x:2x2x1
jax: 0.10.0
libtpu: 0.0.40
codegen_flags: <defaults>
</compile_context>

<pallas_src>
import functools

import jax
import jax.numpy as jnp
from jax.experimental import pallas as pl
from jax.experimental.pallas import tpu as pltpu

LANE = 128


def _round_up(v, m):
    return ((v + m - 1) // m) * m


def _pad2(a, rows, cols):
    return jnp.pad(a, ((0, rows - a.shape[0]), (0, cols - a.shape[1])))


def _fused_sage_kernel(adj_ref, x_ref, invdeg_ref, w1_ref, b1_ref, w2_ref, b2_ref,
                       out_ref, h_ref, acc_ref):
    """Grid = (layer_phase, row_block, contraction_block).

    Phase 0: h[m-block]      = [mean_agg(x), x_root] @ [Wl1;Wr1] + b1   (kept in VMEM)
    Phase 1: logits[m-block] = [mean_agg(h), h_root] @ [Wl2;Wr2] + b2   (written to HBM)
    """
    l = pl.program_id(0)            # layer phase (0: hidden, 1: logits)
    m = pl.program_id(1)            # node row block
    k = pl.program_id(2)            # contraction block over adjacency columns
    nk = pl.num_programs(2)
    tm, tk = adj_ref.shape

    @pl.when(k == 0)
    def _init_acc():
        acc_ref[...] = jnp.zeros_like(acc_ref)

    adj_blk = adj_ref[...]                                     # (tm, tk) bf16 (exact 0/1)
    col0 = pl.multiple_of(k * tk, tk)
    row0 = pl.multiple_of(m * tm, tm)

    # --- neighbor aggregation: acc += adj_block @ src_block (bf16 MXU, f32 accumulate) ---
    @pl.when(l == 0)
    def _agg_x():
        src = x_ref[pl.ds(col0, tk), :].astype(jnp.bfloat16)   # (tk, FP)
        acc_ref[...] += jnp.dot(adj_blk, src, preferred_element_type=jnp.float32)

    @pl.when(l == 1)
    def _agg_h():
        src = h_ref[pl.ds(col0, tk), :].astype(jnp.bfloat16)   # (tk, FP) hidden in VMEM
        acc_ref[...] += jnp.dot(adj_blk, src, preferred_element_type=jnp.float32)

    is_last_k = k == nk - 1

    # --- finalize: mean-normalize (precomputed 1/deg), fused [Wl;Wr] transform, emit ---
    @pl.when(is_last_k & (l == 0))
    def _finalize_layer1():
        agg = acc_ref[...] * invdeg_ref[...]                   # (tm, FP)
        root = x_ref[pl.ds(row0, tm), :]                       # self features, f32
        z = jnp.concatenate([agg, root], axis=-1)              # (tm, 2*FP)
        h = jnp.dot(z, w1_ref[...], preferred_element_type=jnp.float32) + b1_ref[...]
        # TODO(synk): inter-layer dropout is identity at inference; a training-mode
        # version would mask h here via pltpu.prng_seed + pltpu.prng_random_bits.
        h_ref[pl.ds(row0, tm), :] = h                          # hidden state stays in VMEM

    @pl.when(is_last_k & (l == 1))
    def _finalize_layer2():
        agg = acc_ref[...] * invdeg_ref[...]
        root = h_ref[pl.ds(row0, tm), :]
        z = jnp.concatenate([agg, root], axis=-1)
        out_ref[...] = (
            jnp.dot(z, w2_ref[...], preferred_element_type=jnp.float32) + b2_ref[...]
        )


def gnn_sage_forward(adj, x, params, *, tm=None, tk=None, interpret=False):
    """Full GNNSage forward in one fused Pallas kernel.

    adj   : (N, N) dense 0/1 adjacency (row i = neighbors of node i)
    x     : (N, in_feats) node features
    params: ((wl1, wr1, b1), (wl2, wr2, b2)); weights pre-transposed to (f_in, f_out),
            biases shaped (1, f_out).
    returns (N, num_classes) f32 logits.
    """
    (wl1, wr1, b1), (wl2, wr2, b2) = params
    n, f_in = x.shape
    hidden = wl1.shape[1]
    n_cls = wl2.shape[1]

    fp = _round_up(max(f_in, hidden, n_cls), LANE)   # lane-dense padded feature width
    npad = _round_up(n, LANE)

    # Tile defaults sized for the 32 MiB default scoped VMEM (v6e/v7x); 128-aligned
    # fallbacks keep v5e happy. Callers may override.
    if tm is None:
        tm = 256 if npad % 256 == 0 else 128
    if tk is None:
        tk = 512 if npad % 512 == 0 else (256 if npad % 256 == 0 else 128)
    tm = min(tm, npad)
    tk = min(tk, npad)
    assert npad % tm == 0 and npad % tk == 0 and tm % 16 == 0 and tk % LANE == 0

    # ---- wrapper-side (f32) preprocessing: degree normalization, padding, bf16 cast ----
    adj = adj.astype(jnp.float32)
    deg = jnp.sum(adj, axis=-1, keepdims=True)
    inv_deg = 1.0 / jnp.maximum(deg, 1.0)                     # PyG mean: isolated nodes -> 0
    inv_deg = jnp.pad(inv_deg, ((0, npad - n), (0, 0)))       # (npad, 1) f32

    adj_bf = _pad2(adj, npad, npad).astype(jnp.bfloat16)      # 0/1 entries exact in bf16
    x_p = _pad2(x.astype(jnp.float32), npad, fp)

    def stack_weights(wl, wr):                                # concat([agg, root]) @ [Wl; Wr]
        return jnp.concatenate([_pad2(wl, fp, fp), _pad2(wr, fp, fp)], axis=0)

    w1 = stack_weights(wl1, wr1)                              # (2*fp, fp) f32, zero-padded
    w2 = stack_weights(wl2, wr2)
    b1p = _pad2(b1.reshape(1, -1).astype(jnp.float32), 1, fp)
    b2p = _pad2(b2.reshape(1, -1).astype(jnp.float32), 1, fp)

    grid = (2, npad // tm, npad // tk)
    const = lambda l, m, k: (0, 0)                            # VMEM-resident operands

    out = pl.pallas_call(
        _fused_sage_kernel,
        out_shape=jax.ShapeDtypeStruct((npad, fp), jnp.float32),
        grid_spec=pltpu.PrefetchScalarGridSpec(
            num_scalar_prefetch=0,
            grid=grid,
            in_specs=[
                pl.BlockSpec((tm, tk), lambda l, m, k: (m, k)),   # adjacency (bf16), streamed
                pl.BlockSpec((npad, fp), const),                  # node features (f32), resident
                pl.BlockSpec((tm, 1), lambda l, m, k: (m, 0)),    # 1/deg per row block
                pl.BlockSpec((2 * fp, fp), const),                # stacked [Wl1; Wr1]
                pl.BlockSpec((1, fp), const),                     # b1
                pl.BlockSpec((2 * fp, fp), const),                # stacked [Wl2; Wr2]
                pl.BlockSpec((1, fp), const),                     # b2
            ],
            # m*l: during the hidden phase (l==0) the output block index is pinned to 0,
            # so no HBM write-back happens until the logits phase actually writes it.
            out_specs=pl.BlockSpec((tm, fp), lambda l, m, k: (m * l, 0)),
            scratch_shapes=[
                pltpu.VMEM((npad, fp), jnp.float32),  # hidden activations h for ALL nodes
                pltpu.VMEM((tm, fp), jnp.float32),    # aggregation accumulator
            ],
        ),
        compiler_params=pltpu.CompilerParams(
            # Row axis must stay "arbitrary": phase 1 reads hidden rows produced by every
            # phase-0 row block out of per-core VMEM scratch.
            dimension_semantics=("arbitrary", "arbitrary", "arbitrary"),
        ),
        interpret=interpret,
    )(adj_bf, x_p, inv_deg, w1, b1p, w2, b2p)

    return out[:n, :n_cls]                                    # slice off lane/row padding


if __name__ == "__main__":
    # Small shapes consistent with the module: N nodes, in_feats -> hidden -> num_classes.
    N, IN_FEATS, HIDDEN, NUM_CLASSES = 64, 16, 32, 8

    key = jax.random.PRNGKey(0)
    k_adj, k_x, k1, k2, k3, k4, k5, k6 = jax.random.split(key, 8)

    # Random sparse undirected graph as a dense adjacency (no self-loops; SAGEConv treats
    # the root node separately via lin_r).
    adj = (jax.random.uniform(k_adj, (N, N)) < 0.1).astype(jnp.float32)
    adj = jnp.maximum(adj, adj.T)
    adj = adj * (1.0 - jnp.eye(N, dtype=jnp.float32))

    x = jax.random.normal(k_x, (N, IN_FEATS), jnp.float32)

    def init_linear(k, fi, fo):                     # Kaiming-uniform-ish, stored as W^T
        bound = 1.0 / jnp.sqrt(jnp.float32(fi))
        return jax.random.uniform(k, (fi, fo), jnp.float32, -bound, bound)

    wl1 = init_linear(k1, IN_FEATS, HIDDEN)
    wr1 = init_linear(k2, IN_FEATS, HIDDEN)
    b1 = jax.random.uniform(k3, (1, HIDDEN), jnp.float32,
                            -1.0 / jnp.sqrt(IN_FEATS), 1.0 / jnp.sqrt(IN_FEATS))
    wl2 = init_linear(k4, HIDDEN, NUM_CLASSES)
    wr2 = init_linear(k5, HIDDEN, NUM_CLASSES)
    b2 = jax.random.uniform(k6, (1, NUM_CLASSES), jnp.float32,
                            -1.0 / jnp.sqrt(HIDDEN), 1.0 / jnp.sqrt(HIDDEN))
    params = ((wl1, wr1, b1), (wl2, wr2, b2))

    # Small tiles so the demo exercises multiple row blocks of the tiled grid.
    fwd = jax.jit(functools.partial(gnn_sage_forward, tm=64, tk=128))
    logits = fwd(adj, x, params)
    jax.block_until_ready(logits)

    assert logits.shape == (N, NUM_CLASSES), logits.shape
    assert logits.dtype == jnp.float32

    # Pure-JAX f32 reference (PyG SAGEConv mean semantics); kernel uses bf16 for the
    # O(N^2) aggregation operands, so compare with a modest tolerance.
    deg_ref = jnp.maximum(jnp.sum(adj, axis=-1, keepdims=True), 1.0)

    def ref_layer(h, wl, wr, b):
        return ((adj @ h) / deg_ref) @ wl + h @ wr + b

    ref = ref_layer(ref_layer(x, wl1, wr1, b1), wl2, wr2, b2)
    err = float(jnp.max(jnp.abs(logits - ref)))
    assert err < 2e-2, f"max abs err vs f32 reference: {err}"

    print("KERNEL_OK")
</pallas_src>

<mosaic_0001>
module attributes {stable_mosaic.version = 11 : i64} {
  func.func @_fused_sage_kernel(%arg0: i32, %arg1: i32, %arg2: i32, %arg3: memref<64x128xbf16, #tpu.memory_space<vmem>>, %arg4: memref<128x128xf32, #tpu.memory_space<vmem>>, %arg5: memref<64x1xf32, #tpu.memory_space<vmem>>, %arg6: memref<256x128xf32, #tpu.memory_space<vmem>>, %arg7: memref<1x128xf32, #tpu.memory_space<vmem>>, %arg8: memref<256x128xf32, #tpu.memory_space<vmem>>, %arg9: memref<1x128xf32, #tpu.memory_space<vmem>>, %arg10: memref<64x128xf32, #tpu.memory_space<vmem>>, %arg11: memref<128x128xf32, #tpu.memory_space<vmem>>, %arg12: memref<64x128xf32, #tpu.memory_space<vmem>>) attributes {dimension_semantics = [#tpu.dimension_semantics<arbitrary>, #tpu.dimension_semantics<arbitrary>, #tpu.dimension_semantics<arbitrary>], iteration_bounds = array<i64: 2, 2, 1>, scalar_prefetch = 0 : i64, scratch_operands = 2 : i64, tpu.core_type = #tpu.core_type<tc>, window_params = [{transform_indices = @transform_0, window_bounds = array<i64: 64, 128>}, {pipeline_mode = #tpu.pipeline_mode<synchronous>, transform_indices = @transform_1, window_bounds = array<i64: 128, 128>}, {transform_indices = @transform_2, window_bounds = array<i64: 64, 1>}, {pipeline_mode = #tpu.pipeline_mode<synchronous>, transform_indices = @transform_3, window_bounds = array<i64: 256, 128>}, {pipeline_mode = #tpu.pipeline_mode<synchronous>, transform_indices = @transform_4, window_bounds = array<i64: 1, 128>}, {pipeline_mode = #tpu.pipeline_mode<synchronous>, transform_indices = @transform_5, window_bounds = array<i64: 256, 128>}, {pipeline_mode = #tpu.pipeline_mode<synchronous>, transform_indices = @transform_6, window_bounds = array<i64: 1, 128>}, {transform_indices = @transform_7, window_bounds = array<i64: 64, 128>}]} {
    %c0_i32 = arith.constant 0 : i32
    %0 = arith.cmpi eq, %arg2, %c0_i32 : i32
    %1 = arith.extui %0 : i1 to i32
    %c0_i32_0 = arith.constant 0 : i32
    %2 = arith.cmpi ne, %1, %c0_i32_0 : i32
    scf.if %2 {
      %cst = arith.constant 0.000000e+00 : f32
      %23 = vector.broadcast %cst : f32 to vector<64x128xf32>
      %c0_10 = arith.constant 0 : index
      %c0_11 = arith.constant 0 : index
      %24 = vector.load %arg12[%c0_10, %c0_11] : memref<64x128xf32, #tpu.memory_space<vmem>>, vector<64x128xf32>
      tpu.vector_store %arg12[%c0_10, %c0_11], %23 {strides = array<i32>} : memref<64x128xf32, #tpu.memory_space<vmem>>, vector<64x128xf32>,
    } else {
    }
    %c0 = arith.constant 0 : index
    %c0_1 = arith.constant 0 : index
    %3 = vector.load %arg3[%c0, %c0_1] : memref<64x128xbf16, #tpu.memory_space<vmem>>, vector<64x128xbf16>
    %c128_i32 = arith.constant 128 : i32
    %4 = arith.muli %arg2, %c128_i32 : i32
    %5 = tpu.assume_multiple %4, 128 : i32
    %c64_i32 = arith.constant 64 : i32
    %6 = arith.muli %arg1, %c64_i32 : i32
    %7 = tpu.assume_multiple %6, 64 : i32
    %c0_i32_2 = arith.constant 0 : i32
    %8 = arith.cmpi eq, %arg0, %c0_i32_2 : i32
    %9 = arith.extui %8 : i1 to i32
    %c0_i32_3 = arith.constant 0 : i32
    %10 = arith.cmpi ne, %9, %c0_i32_3 : i32
    scf.if %10 {
      %23 = arith.index_cast %5 : i32 to index
      %c0_10 = arith.constant 0 : index
      %24 = vector.load %arg4[%23, %c0_10] : memref<128x128xf32, #tpu.memory_space<vmem>>, vector<128x128xf32>
      %25 = arith.truncf %24 : vector<128x128xf32> to vector<128x128xbf16>
      %c0_11 = arith.constant 0 : index
      %c0_12 = arith.constant 0 : index
      %26 = vector.load %arg12[%c0_11, %c0_12] : memref<64x128xf32, #tpu.memory_space<vmem>>, vector<64x128xf32>
      %cst = arith.constant dense<0.000000e+00> : vector<64x128xf32>
      %27 = tpu.matmul %3, %25, %cst {dimension_numbers = #tpu.dot_dimension_numbers<[1], [0], [0], [1], [0, 0, 1, 1], [], []>} : vector<64x128xbf16>, vector<128x128xbf16>, vector<64x128xf32> -> vector<64x128xf32>
      %28 = arith.addf %26, %27 : vector<64x128xf32>
      %c0_13 = arith.constant 0 : index
      %c0_14 = arith.constant 0 : index
      %29 = vector.load %arg12[%c0_13, %c0_14] : memref<64x128xf32, #tpu.memory_space<vmem>>, vector<64x128xf32>
      tpu.vector_store %arg12[%c0_13, %c0_14], %28 {strides = array<i32>} : memref<64x128xf32, #tpu.memory_space<vmem>>, vector<64x128xf32>,
    } else {
    }
    %c1_i32 = arith.constant 1 : i32
    %11 = arith.cmpi eq, %arg0, %c1_i32 : i32
    %12 = arith.extui %11 : i1 to i32
    %c0_i32_4 = arith.constant 0 : i32
    %13 = arith.cmpi ne, %12, %c0_i32_4 : i32
    scf.if %13 {
      %23 = arith.index_cast %5 : i32 to index
      %c0_10 = arith.constant 0 : index
      %24 = vector.load %arg11[%23, %c0_10] : memref<128x128xf32, #tpu.memory_space<vmem>>, vector<128x128xf32>
      %25 = arith.truncf %24 : vector<128x128xf32> to vector<128x128xbf16>
      %c0_11 = arith.constant 0 : index
      %c0_12 = arith.constant 0 : index
      %26 = vector.load %arg12[%c0_11, %c0_12] : memref<64x128xf32, #tpu.memory_space<vmem>>, vector<64x128xf32>
      %cst = arith.constant dense<0.000000e+00> : vector<64x128xf32>
      %27 = tpu.matmul %3, %25, %cst {dimension_numbers = #tpu.dot_dimension_numbers<[1], [0], [0], [1], [0, 0, 1, 1], [], []>} : vector<64x128xbf16>, vector<128x128xbf16>, vector<64x128xf32> -> vector<64x128xf32>
      %28 = arith.addf %26, %27 : vector<64x128xf32>
      %c0_13 = arith.constant 0 : index
      %c0_14 = arith.constant 0 : index
      %29 = vector.load %arg12[%c0_13, %c0_14] : memref<64x128xf32, #tpu.memory_space<vmem>>, vector<64x128xf32>
      tpu.vector_store %arg12[%c0_13, %c0_14], %28 {strides = array<i32>} : memref<64x128xf32, #tpu.memory_space<vmem>>, vector<64x128xf32>,
    } else {
    }
    %c0_i32_5 = arith.constant 0 : i32
    %14 = arith.cmpi eq, %arg2, %c0_i32_5 : i32
    %c0_i32_6 = arith.constant 0 : i32
    %15 = arith.cmpi eq, %arg0, %c0_i32_6 : i32
    %16 = arith.andi %14, %15 : i1
    %17 = arith.extui %16 : i1 to i32
    %c0_i32_7 = arith.constant 0 : i32
    %18 = arith.cmpi ne, %17, %c0_i32_7 : i32
    scf.if %18 {
      %c0_10 = arith.constant 0 : index
      %c0_11 = arith.constant 0 : index
      %23 = vector.load %arg12[%c0_10, %c0_11] : memref<64x128xf32, #tpu.memory_space<vmem>>, vector<64x128xf32>
      %c0_12 = arith.constant 0 : index
      %c0_13 = arith.constant 0 : index
      %24 = vector.load %arg5[%c0_12, %c0_13] : memref<64x1xf32, #tpu.memory_space<vmem>>, vector<64x1xf32>
      %25 = vector.broadcast %24 : vector<64x1xf32> to vector<64x128xf32>
      %26 = arith.mulf %23, %25 : vector<64x128xf32>
      %27 = arith.index_cast %7 : i32 to index
      %c0_14 = arith.constant 0 : index
      %28 = vector.load %arg4[%27, %c0_14] : memref<128x128xf32, #tpu.memory_space<vmem>>, vector<64x128xf32>
      %29 = tpu.concatenate %26, %28 in 1 : vector<64x128xf32>, vector<64x128xf32> -> vector<64x256xf32>
      %c0_15 = arith.constant 0 : index
      %c0_16 = arith.constant 0 : index
      %30 = vector.load %arg6[%c0_15, %c0_16] : memref<256x128xf32, #tpu.memory_space<vmem>>, vector<256x128xf32>
      %cst = arith.constant dense<0.000000e+00> : vector<64x128xf32>
      %31 = tpu.matmul %29, %30, %cst {dimension_numbers = #tpu.dot_dimension_numbers<[1], [0], [0], [1], [0, 0, 1, 1], [], []>} : vector<64x256xf32>, vector<256x128xf32>, vector<64x128xf32> -> vector<64x128xf32>
      %c0_17 = arith.constant 0 : index
      %c0_18 = arith.constant 0 : index
      %32 = vector.load %arg7[%c0_17, %c0_18] : memref<1x128xf32, #tpu.memory_space<vmem>>, vector<1x128xf32>
      %33 = vector.broadcast %32 : vector<1x128xf32> to vector<64x128xf32>
      %34 = arith.addf %31, %33 : vector<64x128xf32>
      %35 = arith.index_cast %7 : i32 to index
      %c0_19 = arith.constant 0 : index
      %36 = vector.load %arg11[%35, %c0_19] : memref<128x128xf32, #tpu.memory_space<vmem>>, vector<64x128xf32>
      tpu.vector_store %arg11[%35, %c0_19], %34 {strides = array<i32>} : memref<128x128xf32, #tpu.memory_space<vmem>>, vector<64x128xf32>,
    } else {
    }
    %c1_i32_8 = arith.constant 1 : i32
    %19 = arith.cmpi eq, %arg0, %c1_i32_8 : i32
    %20 = arith.andi %14, %19 : i1
    %21 = arith.extui %20 : i1 to i32
    %c0_i32_9 = arith.constant 0 : i32
    %22 = arith.cmpi ne, %21, %c0_i32_9 : i32
    scf.if %22 {
      %c0_10 = arith.constant 0 : index
      %c0_11 = arith.constant 0 : index
      %23 = vector.load %arg12[%c0_10, %c0_11] : memref<64x128xf32, #tpu.memory_space<vmem>>, vector<64x128xf32>
      %c0_12 = arith.constant 0 : index
      %c0_13 = arith.constant 0 : index
      %24 = vector.load %arg5[%c0_12, %c0_13] : memref<64x1xf32, #tpu.memory_space<vmem>>, vector<64x1xf32>
      %25 = vector.broadcast %24 : vector<64x1xf32> to vector<64x128xf32>
      %26 = arith.mulf %23, %25 : vector<64x128xf32>
      %27 = arith.index_cast %7 : i32 to index
      %c0_14 = arith.constant 0 : index
      %28 = vector.load %arg11[%27, %c0_14] : memref<128x128xf32, #tpu.memory_space<vmem>>, vector<64x128xf32>
      %29 = tpu.concatenate %26, %28 in 1 : vector<64x128xf32>, vector<64x128xf32> -> vector<64x256xf32>
      %c0_15 = arith.constant 0 : index
      %c0_16 = arith.constant 0 : index
      %30 = vector.load %arg8[%c0_15, %c0_16] : memref<256x128xf32, #tpu.memory_space<vmem>>, vector<256x128xf32>
      %cst = arith.constant dense<0.000000e+00> : vector<64x128xf32>
      %31 = tpu.matmul %29, %30, %cst {dimension_numbers = #tpu.dot_dimension_numbers<[1], [0], [0], [1], [0, 0, 1, 1], [], []>} : vector<64x256xf32>, vector<256x128xf32>, vector<64x128xf32> -> vector<64x128xf32>
      %c0_17 = arith.constant 0 : index
      %c0_18 = arith.constant 0 : index
      %32 = vector.load %arg9[%c0_17, %c0_18] : memref<1x128xf32, #tpu.memory_space<vmem>>, vector<1x128xf32>
      %33 = vector.broadcast %32 : vector<1x128xf32> to vector<64x128xf32>
      %34 = arith.addf %31, %33 : vector<64x128xf32>
      %c0_19 = arith.constant 0 : index
      %c0_20 = arith.constant 0 : index
      %35 = vector.load %arg10[%c0_19, %c0_20] : memref<64x128xf32, #tpu.memory_space<vmem>>, vector<64x128xf32>
      tpu.vector_store %arg10[%c0_19, %c0_20], %34 {strides = array<i32>} : memref<64x128xf32, #tpu.memory_space<vmem>>, vector<64x128xf32>,
    } else {
    }
    return
  }
  func.func @transform_0(%arg0: i32, %arg1: i32, %arg2: i32) -> (i32, i32) {
    %c0_i32 = arith.constant 0 : i32
    return %arg1, %arg2 : i32, i32
  }
  func.func @transform_1(%arg0: i32, %arg1: i32, %arg2: i32) -> (i32, i32) {
    %c0_i32 = arith.constant 0 : i32
    %c0_i32_0 = arith.constant 0 : i32
    %c0_i32_1 = arith.constant 0 : i32
    return %c0_i32, %c0_i32_0 : i32, i32
  }
  func.func @transform_2(%arg0: i32, %arg1: i32, %arg2: i32) -> (i32, i32) {
    %c0_i32 = arith.constant 0 : i32
    %c0_i32_0 = arith.constant 0 : i32
    return %arg1, %c0_i32 : i32, i32
  }
  func.func @transform_3(%arg0: i32, %arg1: i32, %arg2: i32) -> (i32, i32) {
    %c0_i32 = arith.constant 0 : i32
    %c0_i32_0 = arith.constant 0 : i32
    %c0_i32_1 = arith.constant 0 : i32
    return %c0_i32, %c0_i32_0 : i32, i32
  }
  func.func @transform_4(%arg0: i32, %arg1: i32, %arg2: i32) -> (i32, i32) {
    %c0_i32 = arith.constant 0 : i32
    %c0_i32_0 = arith.constant 0 : i32
    %c0_i32_1 = arith.constant 0 : i32
    return %c0_i32, %c0_i32_0 : i32, i32
  }
  func.func @transform_5(%arg0: i32, %arg1: i32, %arg2: i32) -> (i32, i32) {
    %c0_i32 = arith.constant 0 : i32
    %c0_i32_0 = arith.constant 0 : i32
    %c0_i32_1 = arith.constant 0 : i32
    return %c0_i32, %c0_i32_0 : i32, i32
  }
  func.func @transform_6(%arg0: i32, %arg1: i32, %arg2: i32) -> (i32, i32) {
    %c0_i32 = arith.constant 0 : i32
    %c0_i32_0 = arith.constant 0 : i32
    %c0_i32_1 = arith.constant 0 : i32
    return %c0_i32, %c0_i32_0 : i32, i32
  }
  func.func @transform_7(%arg0: i32, %arg1: i32, %arg2: i32) -> (i32, i32) {
    %0 = arith.muli %arg1, %arg0 : i32
    %c0_i32 = arith.constant 0 : i32
    %c0_i32_0 = arith.constant 0 : i32
    return %0, %c0_i32 : i32, i32
  }
}

</mosaic_0001>

<llo_original>
// kernel: gnn_sage_forward.1
$region0: #{gnn_sage_forward.1}
  #allocation0 [shape = 'u32[]', space=smem, size = 0x4, offset = 0x4, fixed_abs, tag = 'smem constant byte address 0x4 - core index']
  #allocation1 [shape = 'u32[144,128]{1,0:T(1,128)}', space=vmem, size = 0x12000, scoped, tag = 'internal scratch']
  #allocation2 [shape = 'f32[128,128]{1,0:T(8,128)}', space=vmem, size = 0x10000, scoped, tag = 'scratch operand']
  #allocation3 [shape = 'f32[64,128]{1,0:T(8,128)}', space=vmem, size = 0x8000, scoped, tag = 'scratch operand']
  %s0 = inlined_call_operand.vmem [shape: bf16[128,128], index: 0, kind: input, shape index: {}]
  %s1 = inlined_call_operand.vmem [shape: f32[128,128], index: 1, kind: input, shape index: {}]
  %s2 = inlined_call_operand.vmem [shape: f32[128,1], index: 2, kind: input, shape index: {}]
  %s3 = inlined_call_operand.vmem [shape: f32[256,128], index: 3, kind: input, shape index: {}]
  %s4 = inlined_call_operand.vmem [shape: f32[1,128], index: 4, kind: input, shape index: {}]
  %s5 = inlined_call_operand.vmem [shape: f32[256,128], index: 5, kind: input, shape index: {}]
  %s6 = inlined_call_operand.vmem [shape: f32[1,128], index: 6, kind: input, shape index: {}]
  %s7 = inlined_call_operand.vmem [shape: f32[128,128], index: 7, kind: output, shape index: {}]
  %s8 = sld [smem:[#allocation0]]
  $region81: #{gnn_sage_forward.1} parent=0
    _
  %s10 = ssub.s32 1, %s8
  %s11 = scalar_select 0, %s10, %s8
  loop: start=0, step=1, limit=6
  $region2: #{gnn_sage_forward.1} parent=0 // loop_pre_header
    _
  $region3: #{gnn_sage_forward.1} parent=0 // loop_header
    %s13 = sphi 0, %s17
    %p14 = scmp.ge.s32.totalorder %s13, 6
    %s20 = sphi 0, %s39
    %s21 = sphi 0, %s35
    %s22 = sphi 0, %s31
    %s23 = sphi 0, %s20
    %s24 = sphi 0, %s21
    %s25 = sphi 0, %s22
    %s26 = sphi 0, %s23
    %s27 = sphi 0, %s24
    %s28 = sphi 0, %s25
    %s44 = sphi 0, %s46
    %s47 = sphi 0, %s44
    %s48 = sphi 0, %s47
    %s64 = sphi 0, %s48
    %s68 = sphi 0, %s68
    %s70 = sphi 0, %s68
    %s71 = sphi 0, %s70
    %s85 = sphi 0, %s71
    %s91 = sphi 0, %s93
    %s94 = sphi 0, %s91
    %s95 = sphi 0, %s94
    %s111 = sphi 0, %s95
    %s115 = sphi 0, %s115
    %s117 = sphi 0, %s115
    %s118 = sphi 0, %s117
    %s132 = sphi 0, %s118
    %s136 = sphi 0, %s136
    %s138 = sphi 0, %s136
    %s139 = sphi 0, %s138
    %s153 = sphi 0, %s139
    %s157 = sphi 0, %s157
    %s159 = sphi 0, %s157
    %s160 = sphi 0, %s159
    %s174 = sphi 0, %s160
    %s178 = sphi 0, %s178
    %s180 = sphi 0, %s178
    %s181 = sphi 0, %s180
    %s195 = sphi 0, %s181
    %s203 = sphi 0, %s205
    %s206 = sphi 0, %s203
    %s207 = sphi 0, %s206
    %s223 = sphi 0, %s207
  $region4: #{gnn_sage_forward.1} parent=0 // loop_header_branch
    %16 = sbr.rel (%p14) target = $region8
  $region5: #{gnn_sage_forward.1} parent=0 // loop_body
    %s18 = ssub.s32 %s13, 1
    %s19 = ssub.s32 %s13, 2
    %s29 = sadd.s32 1, %s22
    %p30 = scmp.ge.s32.totalorder %s29, 1
    %s31 = scalar_select %p30, 0, %s29
    %s32 = sadd.s32 1, %s21
    %s33 = scalar_select %p30, %s32, %s21
    %p34 = scmp.ge.s32.totalorder %s33, 2
    %s35 = scalar_select %p34, 0, %s33
    %s36 = sadd.s32 1, %s20
    %s37 = scalar_select %p34, %s36, %s20
    %p38 = scmp.ge.s32.totalorder %s37, 2
    %s39 = scalar_select %p38, 0, %s37
    %s40 = ssub.s32 %s21, %s35
    %s41 = ssub.s32 %s22, %s31
    %s42 = sor.u32 %s40, %s41
    %p43 = scmp.eq.s32.totalorder %s42, 0
    %s45 = sadd.s32 %s44, 1
    %s46 = scalar_select %p43, %s44, %s45
    %p49 = pneg %p43
    %p50 = scmp.eq.s32.totalorder %s13, 3
    %p51 = por %p49, %p50
    %p52 = scmp.ne.s32.totalorder %s44, %s47
    %p53 = scmp.eq.s32.totalorder %s13, 0
    %p54 = por %p52, %p53
    %p55 = scmp.ne.s32.totalorder %s44, %s47
    %p56 = scmp.eq.s32.totalorder %s18, 3
    %p57 = por %p55, %p56
    %p58 = scmp.ne.s32.totalorder %s47, %s48
    %p59 = scmp.eq.s32.totalorder %s18, 0
    %p60 = por %p58, %p59
    %p61 = scmp.ne.s32.totalorder %s47, %s48
    %p62 = scmp.eq.s32.totalorder %s19, 3
    %p63 = por %p61, %p62
    %p65 = scmp.ne.s32.totalorder %s48, %s64
    %p66 = scmp.eq.s32.totalorder %s19, 0
    %p67 = por %p65, %p66
    %s69 = sadd.s32 %s68, 1
    %p72 = scmp.eq.s32.totalorder %s13, 3
    %p73 = scmp.ne.s32.totalorder %s68, %s70
    %p74 = scmp.eq.s32.totalorder %s13, 0
    %p75 = por %p73, %p74
    %p76 = scmp.ne.s32.totalorder %s68, %s70
    %p77 = scmp.eq.s32.totalorder %s18, 3
    %p78 = por %p76, %p77
    %p79 = scmp.ne.s32.totalorder %s70, %s71
    %p80 = scmp.eq.s32.totalorder %s18, 0
    %p81 = por %p79, %p80
    %p82 = scmp.ne.s32.totalorder %s70, %s71
    %p83 = scmp.eq.s32.totalorder %s19, 3
    %p84 = por %p82, %p83
    %p86 = scmp.ne.s32.totalorder %s71, %s85
    %p87 = scmp.eq.s32.totalorder %s19, 0
    %p88 = por %p86, %p87
    %s89 = ssub.s32 %s21, %s35
    %p90 = scmp.eq.s32.totalorder %s89, 0
    %s92 = sadd.s32 %s91, 1
    %s93 = scalar_select %p90, %s91, %s92
    %p96 = pneg %p90
    %p97 = scmp.eq.s32.totalorder %s13, 3
    %p98 = por %p96, %p97
    %p99 = scmp.ne.s32.totalorder %s91, %s94
    %p100 = scmp.eq.s32.totalorder %s13, 0
    %p101 = por %p99, %p100
    %p102 = scmp.ne.s32.totalorder %s91, %s94
    %p103 = scmp.eq.s32.totalorder %s18, 3
    %p104 = por %p102, %p103
    %p105 = scmp.ne.s32.totalorder %s94, %s95
    %p106 = scmp.eq.s32.totalorder %s18, 0
    %p107 = por %p105, %p106
    %p108 = scmp.ne.s32.totalorder %s94, %s95
    %p109 = scmp.eq.s32.totalorder %s19, 3
    %p110 = por %p108, %p109
    %p112 = scmp.ne.s32.totalorder %s95, %s111
    %p113 = scmp.eq.s32.totalorder %s19, 0
    %p114 = por %p112, %p113
    %s116 = sadd.s32 %s115, 1
    %p119 = scmp.eq.s32.totalorder %s13, 3
    %p120 = scmp.ne.s32.totalorder %s115, %s117
    %p121 = scmp.eq.s32.totalorder %s13, 0
    %p122 = por %p120, %p121
    %p123 = scmp.ne.s32.totalorder %s115, %s117
    %p124 = scmp.eq.s32.totalorder %s18, 3
    %p125 = por %p123, %p124
    %p126 = scmp.ne.s32.totalorder %s117, %s118
    %p127 = scmp.eq.s32.totalorder %s18, 0
    %p128 = por %p126, %p127
    %p129 = scmp.ne.s32.totalorder %s117, %s118
    %p130 = scmp.eq.s32.totalorder %s19, 3
    %p131 = por %p129, %p130
    %p133 = scmp.ne.s32.totalorder %s118, %s132
    %p134 = scmp.eq.s32.totalorder %s19, 0
    %p135 = por %p133, %p134
    %s137 = sadd.s32 %s136, 1
    %p140 = scmp.eq.s32.totalorder %s13, 3
    %p141 = scmp.ne.s32.totalorder %s136, %s138
    %p142 = scmp.eq.s32.totalorder %s13, 0
    %p143 = por %p141, %p142
    %p144 = scmp.ne.s32.totalorder %s136, %s138
    %p145 = scmp.eq.s32.totalorder %s18, 3
    %p146 = por %p144, %p145
    %p147 = scmp.ne.s32.totalorder %s138, %s139
    %p148 = scmp.eq.s32.totalorder %s18, 0
    %p149 = por %p147, %p148
    %p150 = scmp.ne.s32.totalorder %s138, %s139
    %p151 = scmp.eq.s32.totalorder %s19, 3
    %p152 = por %p150, %p151
    %p154 = scmp.ne.s32.totalorder %s139, %s153
    %p155 = scmp.eq.s32.totalorder %s19, 0
    %p156 = por %p154, %p155
    %s158 = sadd.s32 %s157, 1
    %p161 = scmp.eq.s32.totalorder %s13, 3
    %p162 = scmp.ne.s32.totalorder %s157, %s159
    %p163 = scmp.eq.s32.totalorder %s13, 0
    %p164 = por %p162, %p163
    %p165 = scmp.ne.s32.totalorder %s157, %s159
    %p166 = scmp.eq.s32.totalorder %s18, 3
    %p167 = por %p165, %p166
    %p168 = scmp.ne.s32.totalorder %s159, %s160
    %p169 = scmp.eq.s32.totalorder %s18, 0
    %p170 = por %p168, %p169
    %p171 = scmp.ne.s32.totalorder %s159, %s160
    %p172 = scmp.eq.s32.totalorder %s19, 3
    %p173 = por %p171, %p172
    %p175 = scmp.ne.s32.totalorder %s160, %s174
    %p176 = scmp.eq.s32.totalorder %s19, 0
    %p177 = por %p175, %p176
    %s179 = sadd.s32 %s178, 1
    %p182 = scmp.eq.s32.totalorder %s13, 3
    %p183 = scmp.ne.s32.totalorder %s178, %s180
    %p184 = scmp.eq.s32.totalorder %s13, 0
    %p185 = por %p183, %p184
    %p186 = scmp.ne.s32.totalorder %s178, %s180
    %p187 = scmp.eq.s32.totalorder %s18, 3
    %p188 = por %p186, %p187
    %p189 = scmp.ne.s32.totalorder %s180, %s181
    %p190 = scmp.eq.s32.totalorder %s18, 0
    %p191 = por %p189, %p190
    %p192 = scmp.ne.s32.totalorder %s180, %s181
    %p193 = scmp.eq.s32.totalorder %s19, 3
    %p194 = por %p192, %p193
    %p196 = scmp.ne.s32.totalorder %s181, %s195
    %p197 = scmp.eq.s32.totalorder %s19, 0
    %p198 = por %p196, %p197
    %s199 = smul.u32 %s21, %s20
    %s200 = smul.u32 %s35, %s39
    %s201 = ssub.s32 %s199, %s200
    %p202 = scmp.eq.s32.totalorder %s201, 0
    %s204 = sadd.s32 %s203, 1
    %s205 = scalar_select %p202, %s203, %s204
    %p208 = pneg %p202
    %p209 = scmp.eq.s32.totalorder %s13, 3
    %p210 = por %p208, %p209
    %p211 = scmp.ne.s32.totalorder %s203, %s206
    %p212 = scmp.eq.s32.totalorder %s13, 0
    %p213 = por %p211, %p212
    %p214 = scmp.ne.s32.totalorder %s203, %s206
    %p215 = scmp.eq.s32.totalorder %s18, 3
    %p216 = por %p214, %p215
    %p217 = scmp.ne.s32.totalorder %s206, %s207
    %p218 = scmp.eq.s32.totalorder %s18, 0
    %p219 = por %p217, %p218
    %p220 = scmp.ne.s32.totalorder %s206, %s207
    %p221 = scmp.eq.s32.totalorder %s19, 3
    %p222 = por %p220, %p221
    %p224 = scmp.ne.s32.totalorder %s207, %s223
    %p225 = scmp.eq.s32.totalorder %s19, 0
    %p226 = por %p224, %p225
    %p227 = scmp.le.s32.totalorder 1, %s13
    %p228 = scmp.lt.s32.totalorder %s13, 5
    %p229 = pnand %p227, %p228
    %p230 = pneg %p229
    // Predicated region
    $region9: #{gnn_sage_forward.1} parent=5 // pred_check
      _
    $region10: #{gnn_sage_forward.1} parent=5 // pred_check_branch
      %232 = sbr.rel (%p229) target = $region12
    $region11: #{gnn_sage_forward.1} parent=5 // pred_region
      %s233 = ssub.s32 %s13, 1
      // Predicated region
      $region13: #{gnn_sage_forward.1} parent=11 // pred_check
        %p234 = pneg %p81
      $region14: #{gnn_sage_forward.1} parent=11 // pred_check_branch
        %236 = sbr.rel (%p234) target = $region16
      $region15: #{gnn_sage_forward.1} parent=11 // pred_region
        _
      $region16: #{gnn_sage_forward.1} parent=11 // pred_fallthru
        _
      // Predicated region
      $region17: #{gnn_sage_forward.1} parent=11 // pred_check
        %p237 = pneg %p128
      $region18: #{gnn_sage_forward.1} parent=11 // pred_check_branch
        %239 = sbr.rel (%p237) target = $region20
      $region19: #{gnn_sage_forward.1} parent=11 // pred_region
        _
      $region20: #{gnn_sage_forward.1} parent=11 // pred_fallthru
        _
      // Predicated region
      $region21: #{gnn_sage_forward.1} parent=11 // pred_check
        %p240 = pneg %p149
      $region22: #{gnn_sage_forward.1} parent=11 // pred_check_branch
        %242 = sbr.rel (%p240) target = $region24
      $region23: #{gnn_sage_forward.1} parent=11 // pred_region
        _
      $region24: #{gnn_sage_forward.1} parent=11 // pred_fallthru
        _
      // Predicated region
      $region25: #{gnn_sage_forward.1} parent=11 // pred_check
        %p243 = pneg %p170
      $region26: #{gnn_sage_forward.1} parent=11 // pred_check_branch
        %245 = sbr.rel (%p243) target = $region28
      $region27: #{gnn_sage_forward.1} parent=11 // pred_region
        _
      $region28: #{gnn_sage_forward.1} parent=11 // pred_fallthru
        _
      // Predicated region
      $region29: #{gnn_sage_forward.1} parent=11 // pred_check
        %p246 = pneg %p191
      $region30: #{gnn_sage_forward.1} parent=11 // pred_check_branch
        %248 = sbr.rel (%p246) target = $region32
      $region31: #{gnn_sage_forward.1} parent=11 // pred_region
        _
      $region32: #{gnn_sage_forward.1} parent=11 // pred_fallthru
        _
    $region12: #{gnn_sage_forward.1} parent=5 // pred_fallthru
      _
    %p249 = scmp.lt.s32.totalorder %s13, 4
    // Predicated region
    $region33: #{gnn_sage_forward.1} parent=5 // pred_check
      %p250 = pneg %p249
    $region34: #{gnn_sage_forward.1} parent=5 // pred_check_branch
      %252 = sbr.rel (%p250) target = $region36
    $region35: #{gnn_sage_forward.1} parent=5 // pred_region
      // Predicated region
      $region37: #{gnn_sage_forward.1} parent=35 // pred_check
        %p253 = pneg %p54
      $region38: #{gnn_sage_forward.1} parent=35 // pred_check_branch
        %255 = sbr.rel (%p253) target = $region40
      $region39: #{gnn_sage_forward.1} parent=35 // pred_region
        %s256 = smul.u32 8, %s21
        %p257 = scmp.lt.s32.totalorder %s256, 15
        %s258 = scalar_select %p257, %s256, 15
        %p259 = scmp.lt.s32.totalorder %s22, 0
        %s260 = scalar_select %p259, %s22, 0
        %s261 = sadd.s32 %s260, %s258
        %s262 = smul.addr %s261, 4
        %s263 = scalar_lea.vmem %s0, %s262
        %s264 = smul.u32 8, %s21
      $region40: #{gnn_sage_forward.1} parent=35 // pred_fallthru
        _
      // Predicated region
      $region41: #{gnn_sage_forward.1} parent=35 // pred_check
        %p265 = pneg %p101
      $region42: #{gnn_sage_forward.1} parent=35 // pred_check_branch
        %267 = sbr.rel (%p265) target = $region44
      $region43: #{gnn_sage_forward.1} parent=35 // pred_region
        %s268 = smul.u32 8, %s21
        %p269 = scmp.lt.s32.totalorder %s268, 15
        %s270 = scalar_select %p269, %s268, 15
        %s271 = smul.addr %s270, 8
        %s272 = scalar_lea.vmem %s2, %s271
        %s273 = smul.u32 8, %s21
      $region44: #{gnn_sage_forward.1} parent=35 // pred_fallthru
        _
    $region36: #{gnn_sage_forward.1} parent=5 // pred_fallthru
      _
    %p274 = scmp.le.s32.totalorder 1, %s13
    %p275 = scmp.lt.s32.totalorder %s13, 5
    %p276 = pnand %p274, %p275
    %p277 = pneg %p276
    // Predicated region
    $region45: #{gnn_sage_forward.1} parent=5 // pred_check
      _
    $region46: #{gnn_sage_forward.1} parent=5 // pred_check_branch
      %279 = sbr.rel (%p276) target = $region48
    $region47: #{gnn_sage_forward.1} parent=5 // pred_region
      %s280 = ssub.s32 %s13, 1
      %s281 = smul.u32 8, %s24
      %p282 = scmp.lt.s32.totalorder %s281, 15
      %s283 = scalar_select %p282, %s281, 15
      %p284 = scmp.lt.s32.totalorder %s25, 0
      %s285 = scalar_select %p284, %s25, 0
      %s286 = sadd.s32 %s285, %s283
      %s287 = smul.addr %s286, 4
      %s288 = scalar_lea.vmem %s0, %s287
      %p289 = pneg %p60
      %p290 = pneg %p57
      %p291 = pneg %p81
      %p292 = pneg %p78
      %s293 = smul.u32 8, %s24
      %p294 = scmp.lt.s32.totalorder %s293, 15
      %s295 = scalar_select %p294, %s293, 15
      %s296 = smul.addr %s295, 8
      %s297 = scalar_lea.vmem %s2, %s296
      %p298 = pneg %p107
      %p299 = pneg %p104
      %p300 = pneg %p128
      %p301 = pneg %p125
      %p302 = pneg %p149
      %p303 = pneg %p146
      %p304 = pneg %p170
      %p305 = pneg %p167
      %p306 = pneg %p191
      %p307 = pneg %p188
      %p308 = pneg %p219
      %p309 = pneg %p216
      %s310 = smul.u32 %s24, %s23
      %s311 = smul.u32 8, %s310
      %p312 = scmp.lt.s32.totalorder %s311, 15
      %s313 = scalar_select %p312, %s311, 15
      %s314 = smul.addr %s313, 8
      %s315 = scalar_lea.vmem %s7, %s314
      %s316 = smul.u32 8, %s24
      %p317 = scmp.lt.s32.totalorder %s316, 15
      %s318 = scalar_select %p317, %s316, 15
      %p319 = scmp.lt.s32.totalorder %s25, 0
      %s320 = scalar_select %p319, %s25, 0
      %s321 = sadd.s32 %s320, %s318
      %s322 = smul.addr %s321, 4
      %s323 = scalar_lea.vmem %s0, %s322
      %s324 = smul.u32 8, %s24
      %s325 = smul.u32 8, %s24
      %p326 = scmp.lt.s32.totalorder %s325, 15
      %s327 = scalar_select %p326, %s325, 15
      %s328 = smul.addr %s327, 8
      %s329 = scalar_lea.vmem %s2, %s328
      %s330 = smul.u32 8, %s24
      %s331 = smul.u32 %s24, %s23
      %s332 = smul.u32 8, %s331
      %p333 = scmp.lt.s32.totalorder %s332, 15
      %s334 = scalar_select %p333, %s332, 15
      %s335 = smul.addr %s334, 8
      %s336 = scalar_lea.vmem %s7, %s335
      %s337 = smul.u32 %s24, %s23
      %s338 = smul.u32 8, %s337
      %p340 = scmp.eq.s32.totalorder %s25, 0
      // Predicated region
      $region49: #{gnn_sage_forward.1} parent=47 // pred_check
        %p341 = pneg %p340
      $region50: #{gnn_sage_forward.1} parent=47 // pred_check_branch
        %343 = sbr.rel (%p341) target = $region52
      $region51: #{gnn_sage_forward.1} parent=47 // pred_region
        %344 = vst [vmem:[#allocation3] sm:$0xff] 0.0
        %345 = vst [vmem:[#allocation3 + $0x8] sm:$0xff] 0.0
        %346 = vst [vmem:[#allocation3 + $0x10] sm:$0xff] 0.0
        %347 = vst [vmem:[#allocation3 + $0x18] sm:$0xff] 0.0
        %348 = vst [vmem:[#allocation3 + $0x20] sm:$0xff] 0.0
        %349 = vst [vmem:[#allocation3 + $0x28] sm:$0xff] 0.0
        %350 = vst [vmem:[#allocation3 + $0x30] sm:$0xff] 0.0
        %351 = vst [vmem:[#allocation3 + $0x38] sm:$0xff] 0.0
      $region52: #{gnn_sage_forward.1} parent=47 // pred_fallthru
        _
      %v352 = vld [vmem:[%s323] sm:$0xf]
      %v353 = vld [vmem:[%s323 + $0x4] sm:$0xf]
      %v354 = vld [vmem:[%s323 + $0x8] sm:$0xf]
      %v355 = vld [vmem:[%s323 + $0xc] sm:$0xf]
      %v356 = vld [vmem:[%s323 + $0x10] sm:$0xf]
      %v357 = vld [vmem:[%s323 + $0x14] sm:$0xf]
      %v358 = vld [vmem:[%s323 + $0x18] sm:$0xf]
      %v359 = vld [vmem:[%s323 + $0x1c] sm:$0xf]
      %s360 = smul.u32 %s25, 128
      %s361 = smul.u32 %s24, 64
      %p362 = scmp.eq.s32.totalorder %s23, 0
      // Predicated region
      $region53: #{gnn_sage_forward.1} parent=47 // pred_check
        %p363 = pneg %p362
      $region54: #{gnn_sage_forward.1} parent=47 // pred_check_branch
        %365 = sbr.rel (%p363) target = $region56
      $region55: #{gnn_sage_forward.1} parent=47 // pred_region
        %s366 = scalar_lea.vmem %s1, %s360
        %v367 = vld [vmem:[%s366] sm:$0xff]
        %v368 = vld [vmem:[%s366 + $0x8] sm:$0xff]
        %v369 = vld [vmem:[%s366 + $0x10] sm:$0xff]
        %v370 = vld [vmem:[%s366 + $0x18] sm:$0xff]
        %v371 = vld [vmem:[%s366 + $0x20] sm:$0xff]
        %v372 = vld [vmem:[%s366 + $0x28] sm:$0xff]
        %v373 = vld [vmem:[%s366 + $0x30] sm:$0xff]
        %v374 = vld [vmem:[%s366 + $0x38] sm:$0xff]
        %v375 = vld [vmem:[%s366 + $0x40] sm:$0xff]
        %v376 = vld [vmem:[%s366 + $0x48] sm:$0xff]
        %v377 = vld [vmem:[%s366 + $0x50] sm:$0xff]
        %v378 = vld [vmem:[%s366 + $0x58] sm:$0xff]
        %v379 = vld [vmem:[%s366 + $0x60] sm:$0xff]
        %v380 = vld [vmem:[%s366 + $0x68] sm:$0xff]
        %v381 = vld [vmem:[%s366 + $0x70] sm:$0xff]
        %v382 = vld [vmem:[%s366 + $0x78] sm:$0xff]
        %v383 = vpack.c.bf16 %v368, %v367
        %v384 = vpack.c.bf16 %v370, %v369
        %v385 = vpack.c.bf16 %v372, %v371
        %v386 = vpack.c.bf16 %v374, %v373
        %v387 = vpack.c.bf16 %v376, %v375
        %v388 = vpack.c.bf16 %v378, %v377
        %v389 = vpack.c.bf16 %v380, %v379
        %v390 = vpack.c.bf16 %v382, %v381
        %v391 = vld [vmem:[#allocation3] sm:$0xff]
        %v392 = vld [vmem:[#allocation3 + $0x8] sm:$0xff]
        %v393 = vld [vmem:[#allocation3 + $0x10] sm:$0xff]
        %v394 = vld [vmem:[#allocation3 + $0x18] sm:$0xff]
        %v395 = vld [vmem:[#allocation3 + $0x20] sm:$0xff]
        %v396 = vld [vmem:[#allocation3 + $0x28] sm:$0xff]
        %v397 = vld [vmem:[#allocation3 + $0x30] sm:$0xff]
        %v398 = vld [vmem:[#allocation3 + $0x38] sm:$0xff]
        %v407 = vunpack.c.l.b16 %v352
        %v408 = vunpack.c.l.b16 %v353
        %v409 = vunpack.c.l.b16 %v354
        %v410 = vunpack.c.l.b16 %v355
        %v411 = vunpack.c.l.b16 %v356
        %v412 = vunpack.c.l.b16 %v357
        %v413 = vunpack.c.l.b16 %v358
        %v414 = vunpack.c.l.b16 %v359
        %v415 = vpack.c.b16 %v408, %v407
        %v416 = vpack.c.b16 %v410, %v409
        %v417 = vpack.c.b16 %v412, %v411
        %v418 = vpack.c.b16 %v414, %v413
        %423 = vmatprep.subr.bf16.mxu0 0
        %424 = vmatpush1.bf16.msra.mxu0 %v383
        %425 = vmatprep.subr.bf16.mxu0 0
        %426 = vmatpush1.bf16.msra.mxu0 %v384
        %427 = vmatprep.subr.bf16.mxu0 0
        %428 = vmatpush1.bf16.msra.mxu0 %v385
        %429 = vmatprep.subr.bf16.mxu0 0
        %430 = vmatpush1.bf16.msra.mxu0 %v386
        %431 = vmatprep.subr.bf16.mxu0 0
        %432 = vmatpush1.bf16.msra.mxu0 %v387
        %433 = vmatprep.subr.bf16.mxu0 0
        %434 = vmatpush1.bf16.msra.mxu0 %v388
        %435 = vmatprep.subr.bf16.mxu0 0
        %436 = vmatpush1.bf16.msra.mxu0 %v389
        %437 = vmatprep.subr.bf16.mxu0 0
        %438 = vmatpush1.bf16.msra.mxu0 %v390
        %439 = vmatprep.subr.bf16.mxu0 0
        %440 = vmatpush1.bf16.msra.mxu0 0
        %441 = vmatprep.subr.bf16.mxu0 0
        %442 = vmatpush1.bf16.msra.mxu0 0
        %443 = vmatprep.subr.bf16.mxu0 0
        %444 = vmatpush1.bf16.msra.mxu0 0
        %445 = vmatprep.subr.bf16.mxu0 0
        %446 = vmatpush1.bf16.msra.mxu0 0
        %447 = vmatprep.subr.bf16.mxu0 0
        %448 = vmatpush1.bf16.msra.mxu0 0
        %449 = vmatprep.subr.bf16.mxu0 0
        %450 = vmatpush1.bf16.msra.mxu0 0
        %451 = vmatprep.subr.bf16.mxu0 0
        %452 = vmatpush1.bf16.msra.mxu0 0
        %453 = vmatprep.subr.bf16.mxu0 0
        %454 = vmatpush1.bf16.msra.mxu0 0
        %455 = vmatprep.mubr.bf16.mxu0 0
        %456 = vmatmul.mubr.bf16.gmra.mrb[0].mxu0 %v415
        %v457 = vpop.f32.mrb[0].mxu0
        %v458 = vadd.f32 0.0, %v457
        %v459 = vpop.f32.mrb[0].mxu0
        %v460 = vpop.f32.mrb[0].mxu0
        %v461 = vadd.f32 0.0, %v460
        %v462 = vpop.f32.mrb[0].mxu0
        %463 = vmatprep.mubr.bf16.mxu0 0
        %464 = vmatmul.mubr.bf16.gmra.mrb[0].mxu0 %v416
        %v465 = vpop.f32.mrb[0].mxu0
        %v466 = vadd.f32 0.0, %v465
        %v467 = vpop.f32.mrb[0].mxu0
        %v468 = vpop.f32.mrb[0].mxu0
        %v469 = vadd.f32 0.0, %v468
        %v470 = vpop.f32.mrb[0].mxu0
        %471 = vmatprep.mubr.bf16.mxu0 0
        %472 = vmatmul.mubr.bf16.gmra.mrb[0].mxu0 %v417
        %v473 = vpop.f32.mrb[0].mxu0
        %v474 = vadd.f32 0.0, %v473
        %v475 = vpop.f32.mrb[0].mxu0
        %v476 = vpop.f32.mrb[0].mxu0
        %v477 = vadd.f32 0.0, %v476
        %v478 = vpop.f32.mrb[0].mxu0
        %479 = vmatprep.mubr.bf16.mxu0 0
        %480 = vmatmul.mubr.bf16.gmra.mrb[0].mxu0 %v418
        %v481 = vpop.f32.mrb[0].mxu0
        %v482 = vadd.f32 0.0, %v481
        %v483 = vpop.f32.mrb[0].mxu0
        %v484 = vpop.f32.mrb[0].mxu0
        %v485 = vadd.f32 0.0, %v484
        %v486 = vpop.f32.mrb[0].mxu0
        %487 = vdwg.mxu0
        %v488 = vadd.f32 %v391, %v458
        %v489 = vadd.f32 %v392, %v461
        %v490 = vadd.f32 %v393, %v466
        %v491 = vadd.f32 %v394, %v469
        %v492 = vadd.f32 %v395, %v474
        %v493 = vadd.f32 %v396, %v477
        %v494 = vadd.f32 %v397, %v482
        %v495 = vadd.f32 %v398, %v485
        %496 = vst [vmem:[#allocation3] sm:$0xff] %v488
        %497 = vst [vmem:[#allocation3 + $0x8] sm:$0xff] %v489
        %498 = vst [vmem:[#allocation3 + $0x10] sm:$0xff] %v490
        %499 = vst [vmem:[#allocation3 + $0x18] sm:$0xff] %v491
        %500 = vst [vmem:[#allocation3 + $0x20] sm:$0xff] %v492
        %501 = vst [vmem:[#allocation3 + $0x28] sm:$0xff] %v493
        %502 = vst [vmem:[#allocation3 + $0x30] sm:$0xff] %v494
        %503 = vst [vmem:[#allocation3 + $0x38] sm:$0xff] %v495
      $region56: #{gnn_sage_forward.1} parent=47 // pred_fallthru
        _
      %p504 = scmp.eq.s32.totalorder %s23, 1
      // Predicated region
      $region57: #{gnn_sage_forward.1} parent=47 // pred_check
        %p505 = pneg %p504
      $region58: #{gnn_sage_forward.1} parent=47 // pred_check_branch
        %507 = sbr.rel (%p505) target = $region60
      $region59: #{gnn_sage_forward.1} parent=47 // pred_region
        %s508 = scalar_lea.vmem [#allocation2], %s360
        %v509 = vld [vmem:[%s508] sm:$0xff]
        %v510 = vld [vmem:[%s508 + $0x8] sm:$0xff]
        %v511 = vld [vmem:[%s508 + $0x10] sm:$0xff]
        %v512 = vld [vmem:[%s508 + $0x18] sm:$0xff]
        %v513 = vld [vmem:[%s508 + $0x20] sm:$0xff]
        %v514 = vld [vmem:[%s508 + $0x28] sm:$0xff]
        %v515 = vld [vmem:[%s508 + $0x30] sm:$0xff]
        %v516 = vld [vmem:[%s508 + $0x38] sm:$0xff]
        %v517 = vld [vmem:[%s508 + $0x40] sm:$0xff]
        %v518 = vld [vmem:[%s508 + $0x48] sm:$0xff]
        %v519 = vld [vmem:[%s508 + $0x50] sm:$0xff]
        %v520 = vld [vmem:[%s508 + $0x58] sm:$0xff]
        %v521 = vld [vmem:[%s508 + $0x60] sm:$0xff]
        %v522 = vld [vmem:[%s508 + $0x68] sm:$0xff]
        %v523 = vld [vmem:[%s508 + $0x70] sm:$0xff]
        %v524 = vld [vmem:[%s508 + $0x78] sm:$0xff]
        %v525 = vpack.c.bf16 %v510, %v509
        %v526 = vpack.c.bf16 %v512, %v511
        %v527 = vpack.c.bf16 %v514, %v513
        %v528 = vpack.c.bf16 %v516, %v515
        %v529 = vpack.c.bf16 %v518, %v517
        %v530 = vpack.c.bf16 %v520, %v519
        %v531 = vpack.c.bf16 %v522, %v521
        %v532 = vpack.c.bf16 %v524, %v523
        %v533 = vld [vmem:[#allocation3] sm:$0xff]
        %v534 = vld [vmem:[#allocation3 + $0x8] sm:$0xff]
        %v535 = vld [vmem:[#allocation3 + $0x10] sm:$0xff]
        %v536 = vld [vmem:[#allocation3 + $0x18] sm:$0xff]
        %v537 = vld [vmem:[#allocation3 + $0x20] sm:$0xff]
        %v538 = vld [vmem:[#allocation3 + $0x28] sm:$0xff]
        %v539 = vld [vmem:[#allocation3 + $0x30] sm:$0xff]
        %v540 = vld [vmem:[#allocation3 + $0x38] sm:$0xff]
        %v549 = vunpack.c.l.b16 %v352
        %v550 = vunpack.c.l.b16 %v353
        %v551 = vunpack.c.l.b16 %v354
        %v552 = vunpack.c.l.b16 %v355
        %v553 = vunpack.c.l.b16 %v356
        %v554 = vunpack.c.l.b16 %v357
        %v555 = vunpack.c.l.b16 %v358
        %v556 = vunpack.c.l.b16 %v359
        %v557 = vpack.c.b16 %v550, %v549
        %v558 = vpack.c.b16 %v552, %v551
        %v559 = vpack.c.b16 %v554, %v553
        %v560 = vpack.c.b16 %v556, %v555
        %565 = vmatprep.subr.bf16.mxu0 0
        %566 = vmatpush1.bf16.msra.mxu0 %v525
        %567 = vmatprep.subr.bf16.mxu0 0
        %568 = vmatpush1.bf16.msra.mxu0 %v526
        %569 = vmatprep.subr.bf16.mxu0 0
        %570 = vmatpush1.bf16.msra.mxu0 %v527
        %571 = vmatprep.subr.bf16.mxu0 0
        %572 = vmatpush1.bf16.msra.mxu0 %v528
        %573 = vmatprep.subr.bf16.mxu0 0
        %574 = vmatpush1.bf16.msra.mxu0 %v529
        %575 = vmatprep.subr.bf16.mxu0 0
        %576 = vmatpush1.bf16.msra.mxu0 %v530
        %577 = vmatprep.subr.bf16.mxu0 0
        %578 = vmatpush1.bf16.msra.mxu0 %v531
        %579 = vmatprep.subr.bf16.mxu0 0
        %580 = vmatpush1.bf16.msra.mxu0 %v532
        %581 = vmatprep.subr.bf16.mxu0 0
        %582 = vmatpush1.bf16.msra.mxu0 0
        %583 = vmatprep.subr.bf16.mxu0 0
        %584 = vmatpush1.bf16.msra.mxu0 0
        %585 = vmatprep.subr.bf16.mxu0 0
        %586 = vmatpush1.bf16.msra.mxu0 0
        %587 = vmatprep.subr.bf16.mxu0 0
        %588 = vmatpush1.bf16.msra.mxu0 0
        %589 = vmatprep.subr.bf16.mxu0 0
        %590 = vmatpush1.bf16.msra.mxu0 0
        %591 = vmatprep.subr.bf16.mxu0 0
        %592 = vmatpush1.bf16.msra.mxu0 0
        %593 = vmatprep.subr.bf16.mxu0 0
        %594 = vmatpush1.bf16.msra.mxu0 0
        %595 = vmatprep.subr.bf16.mxu0 0
        %596 = vmatpush1.bf16.msra.mxu0 0
        %597 = vmatprep.mubr.bf16.mxu0 0
        %598 = vmatmul.mubr.bf16.gmra.mrb[0].mxu0 %v557
        %v599 = vpop.f32.mrb[0].mxu0
        %v600 = vadd.f32 0.0, %v599
        %v601 = vpop.f32.mrb[0].mxu0
        %v602 = vpop.f32.mrb[0].mxu0
        %v603 = vadd.f32 0.0, %v602
        %v604 = vpop.f32.mrb[0].mxu0
        %605 = vmatprep.mubr.bf16.mxu0 0
        %606 = vmatmul.mubr.bf16.gmra.mrb[0].mxu0 %v558
        %v607 = vpop.f32.mrb[0].mxu0
        %v608 = vadd.f32 0.0, %v607
        %v609 = vpop.f32.mrb[0].mxu0
        %v610 = vpop.f32.mrb[0].mxu0
        %v611 = vadd.f32 0.0, %v610
        %v612 = vpop.f32.mrb[0].mxu0
        %613 = vmatprep.mubr.bf16.mxu0 0
        %614 = vmatmul.mubr.bf16.gmra.mrb[0].mxu0 %v559
        %v615 = vpop.f32.mrb[0].mxu0
        %v616 = vadd.f32 0.0, %v615
        %v617 = vpop.f32.mrb[0].mxu0
        %v618 = vpop.f32.mrb[0].mxu0
        %v619 = vadd.f32 0.0, %v618
        %v620 = vpop.f32.mrb[0].mxu0
        %621 = vmatprep.mubr.bf16.mxu0 0
        %622 = vmatmul.mubr.bf16.gmra.mrb[0].mxu0 %v560
        %v623 = vpop.f32.mrb[0].mxu0
        %v624 = vadd.f32 0.0, %v623
        %v625 = vpop.f32.mrb[0].mxu0
        %v626 = vpop.f32.mrb[0].mxu0
        %v627 = vadd.f32 0.0, %v626
        %v628 = vpop.f32.mrb[0].mxu0
        %629 = vdwg.mxu0
        %v630 = vadd.f32 %v533, %v600
        %v631 = vadd.f32 %v534, %v603
        %v632 = vadd.f32 %v535, %v608
        %v633 = vadd.f32 %v536, %v611
        %v634 = vadd.f32 %v537, %v616
        %v635 = vadd.f32 %v538, %v619
        %v636 = vadd.f32 %v539, %v624
        %v637 = vadd.f32 %v540, %v627
        %638 = vst [vmem:[#allocation3] sm:$0xff] %v630
        %639 = vst [vmem:[#allocation3 + $0x8] sm:$0xff] %v631
        %640 = vst [vmem:[#allocation3 + $0x10] sm:$0xff] %v632
        %641 = vst [vmem:[#allocation3 + $0x18] sm:$0xff] %v633
        %642 = vst [vmem:[#allocation3 + $0x20] sm:$0xff] %v634
        %643 = vst [vmem:[#allocation3 + $0x28] sm:$0xff] %v635
        %644 = vst [vmem:[#allocation3 + $0x30] sm:$0xff] %v636
        %645 = vst [vmem:[#allocation3 + $0x38] sm:$0xff] %v637
      $region60: #{gnn_sage_forward.1} parent=47 // pred_fallthru
        _
      %p646 = pnand %p340, %p362
      %p647 = pneg %p646
      // Predicated region
      $region61: #{gnn_sage_forward.1} parent=47 // pred_check
        _
      $region62: #{gnn_sage_forward.1} parent=47 // pred_check_branch
        %649 = sbr.rel (%p646) target = $region64
      $region63: #{gnn_sage_forward.1} parent=47 // pred_region
        %v650 = vld [vmem:[#allocation3] sm:$0xff]
        %v651 = vld [vmem:[#allocation3 + $0x8] sm:$0xff]
        %v652 = vld [vmem:[#allocation3 + $0x10] sm:$0xff]
        %v653 = vld [vmem:[#allocation3 + $0x18] sm:$0xff]
        %v654 = vld [vmem:[#allocation3 + $0x20] sm:$0xff]
        %v655 = vld [vmem:[#allocation3 + $0x28] sm:$0xff]
        %v656 = vld [vmem:[#allocation3 + $0x30] sm:$0xff]
        %v657 = vld [vmem:[#allocation3 + $0x38] sm:$0xff]
        %v658 = vld [vmem:[%s329] sm:$0xff]
        %v659 = vld [vmem:[%s329 + $0x8] sm:$0xff]
        %v660 = vld [vmem:[%s329 + $0x10] sm:$0xff]
        %v661 = vld [vmem:[%s329 + $0x18] sm:$0xff]
        %v662 = vld [vmem:[%s329 + $0x20] sm:$0xff]
        %v663 = vld [vmem:[%s329 + $0x28] sm:$0xff]
        %v664 = vld [vmem:[%s329 + $0x30] sm:$0xff]
        %v665 = vld [vmem:[%s329 + $0x38] sm:$0xff]
        %667 = vset.pattern.permute.xlu0 0
        %668 = vperm.xlu0 %667, %v658
        %v669 = vpop.permute.xlu0 %668
        %672 = vset.pattern.permute.xlu0 0
        %673 = vperm.xlu0 %672, %v659
        %v674 = vpop.permute.xlu0 %673
        %677 = vset.pattern.permute.xlu0 0
        %678 = vperm.xlu0 %677, %v660
        %v679 = vpop.permute.xlu0 %678
        %682 = vset.pattern.permute.xlu0 0
        %683 = vperm.xlu0 %682, %v661
        %v684 = vpop.permute.xlu0 %683
        %687 = vset.pattern.permute.xlu0 0
        %688 = vperm.xlu0 %687, %v662
        %v689 = vpop.permute.xlu0 %688
        %692 = vset.pattern.permute.xlu0 0
        %693 = vperm.xlu0 %692, %v663
        %v694 = vpop.permute.xlu0 %693
        %697 = vset.pattern.permute.xlu0 0
        %698 = vperm.xlu0 %697, %v664
        %v699 = vpop.permute.xlu0 %698
        %702 = vset.pattern.permute.xlu0 0
        %703 = vperm.xlu0 %702, %v665
        %v704 = vpop.permute.xlu0 %703
        %v706 = vmul.f32 %v650, %v669
        %v707 = vmul.f32 %v651, %v674
        %v708 = vmul.f32 %v652, %v679
        %v709 = vmul.f32 %v653, %v684
        %v710 = vmul.f32 %v654, %v689
        %v711 = vmul.f32 %v655, %v694
        %v712 = vmul.f32 %v656, %v699
        %v713 = vmul.f32 %v657, %v704
        %s714 = scalar_lea.vmem %s1, %s361
        %v715 = vld [vmem:[%s714] sm:$0xff]
        %v716 = vld [vmem:[%s714 + $0x8] sm:$0xff]
        %v717 = vld [vmem:[%s714 + $0x10] sm:$0xff]
        %v718 = vld [vmem:[%s714 + $0x18] sm:$0xff]
        %v719 = vld [vmem:[%s714 + $0x20] sm:$0xff]
        %v720 = vld [vmem:[%s714 + $0x28] sm:$0xff]
        %v721 = vld [vmem:[%s714 + $0x30] sm:$0xff]
        %v722 = vld [vmem:[%s714 + $0x38] sm:$0xff]
        %v723 = vld [vmem:[%s3] sm:$0xff]
        %v724 = vld [vmem:[%s3 + $0x8] sm:$0xff]
        %v725 = vld [vmem:[%s3 + $0x10] sm:$0xff]
        %v726 = vld [vmem:[%s3 + $0x18] sm:$0xff]
        %v727 = vld [vmem:[%s3 + $0x20] sm:$0xff]
        %v728 = vld [vmem:[%s3 + $0x28] sm:$0xff]
        %v729 = vld [vmem:[%s3 + $0x30] sm:$0xff]
        %v730 = vld [vmem:[%s3 + $0x38] sm:$0xff]
        %v731 = vld [vmem:[%s3 + $0x40] sm:$0xff]
        %v732 = vld [vmem:[%s3 + $0x48] sm:$0xff]
        %v733 = vld [vmem:[%s3 + $0x50] sm:$0xff]
        %v734 = vld [vmem:[%s3 + $0x58] sm:$0xff]
        %v735 = vld [vmem:[%s3 + $0x60] sm:$0xff]
        %v736 = vld [vmem:[%s3 + $0x68] sm:$0xff]
        %v737 = vld [vmem:[%s3 + $0x70] sm:$0xff]
        %v738 = vld [vmem:[%s3 + $0x78] sm:$0xff]
        %v739 = vld [vmem:[%s3 + $0x80] sm:$0xff]
        %v740 = vld [vmem:[%s3 + $0x88] sm:$0xff]
        %v741 = vld [vmem:[%s3 + $0x90] sm:$0xff]
        %v742 = vld [vmem:[%s3 + $0x98] sm:$0xff]
        %v743 = vld [vmem:[%s3 + $0xa0] sm:$0xff]
        %v744 = vld [vmem:[%s3 + $0xa8] sm:$0xff]
        %v745 = vld [vmem:[%s3 + $0xb0] sm:$0xff]
        %v746 = vld [vmem:[%s3 + $0xb8] sm:$0xff]
        %v747 = vld [vmem:[%s3 + $0xc0] sm:$0xff]
        %v748 = vld [vmem:[%s3 + $0xc8] sm:$0xff]
        %v749 = vld [vmem:[%s3 + $0xd0] sm:$0xff]
        %v750 = vld [vmem:[%s3 + $0xd8] sm:$0xff]
        %v751 = vld [vmem:[%s3 + $0xe0] sm:$0xff]
        %v752 = vld [vmem:[%s3 + $0xe8] sm:$0xff]
        %v753 = vld [vmem:[%s3 + $0xf0] sm:$0xff]
        %v754 = vld [vmem:[%s3 + $0xf8] sm:$0xff]
        %v755 = vld [vmem:[%s4] sm:$0x1]
        %v757 = vlaneseq
        %v758 = vshrl.u32 %v757, 7
        %v759 = vsub.s32 0, %v758
        %v760 = vrot.slane %v755, %v759
        %762 = vmatprep.subr.mxu0 0.0
        %763 = vmatpush1.msra.mxu0 %v723
        %764 = vmatprep.subr.mxu0 0.0
        %765 = vmatpush1.msra.mxu0 %v724
        %766 = vmatprep.subr.mxu0 0.0
        %767 = vmatpush1.msra.mxu0 %v725
        %768 = vmatprep.subr.mxu0 0.0
        %769 = vmatpush1.msra.mxu0 %v726
        %770 = vmatprep.subr.mxu0 0.0
        %771 = vmatpush1.msra.mxu0 %v727
        %772 = vmatprep.subr.mxu0 0.0
        %773 = vmatpush1.msra.mxu0 %v728
        %774 = vmatprep.subr.mxu0 0.0
        %775 = vmatpush1.msra.mxu0 %v729
        %776 = vmatprep.subr.mxu0 0.0
        %777 = vmatpush1.msra.mxu0 %v730
        %778 = vmatprep.subr.mxu0 0.0
        %779 = vmatpush1.msra.mxu0 %v731
        %780 = vmatprep.subr.mxu0 0.0
        %781 = vmatpush1.msra.mxu0 %v732
        %782 = vmatprep.subr.mxu0 0.0
        %783 = vmatpush1.msra.mxu0 %v733
        %784 = vmatprep.subr.mxu0 0.0
        %785 = vmatpush1.msra.mxu0 %v734
        %786 = vmatprep.subr.mxu0 0.0
        %787 = vmatpush1.msra.mxu0 %v735
        %788 = vmatprep.subr.mxu0 0.0
        %789 = vmatpush1.msra.mxu0 %v736
        %790 = vmatprep.subr.mxu0 0.0
        %791 = vmatpush1.msra.mxu0 %v737
        %792 = vmatprep.subr.mxu0 0.0
        %793 = vmatpush1.msra.mxu0 %v738
        %794 = vmatprep.subr.mxu0 0.0
        %795 = vmatpush1.msra.mxu0 %v739
        %796 = vmatprep.subr.mxu0 0.0
        %797 = vmatpush1.msra.mxu0 %v740
        %798 = vmatprep.subr.mxu0 0.0
        %799 = vmatpush1.msra.mxu0 %v741
        %800 = vmatprep.subr.mxu0 0.0
        %801 = vmatpush1.msra.mxu0 %v742
        %802 = vmatprep.subr.mxu0 0.0
        %803 = vmatpush1.msra.mxu0 %v743
        %804 = vmatprep.subr.mxu0 0.0
        %805 = vmatpush1.msra.mxu0 %v744
        %806 = vmatprep.subr.mxu0 0.0
        %807 = vmatpush1.msra.mxu0 %v745
        %808 = vmatprep.subr.mxu0 0.0
        %809 = vmatpush1.msra.mxu0 %v746
        %810 = vmatprep.subr.mxu0 0.0
        %811 = vmatpush1.msra.mxu0 %v747
        %812 = vmatprep.subr.mxu0 0.0
        %813 = vmatpush1.msra.mxu0 %v748
        %814 = vmatprep.subr.mxu0 0.0
        %815 = vmatpush1.msra.mxu0 %v749
        %816 = vmatprep.subr.mxu0 0.0
        %817 = vmatpush1.msra.mxu0 %v750
        %818 = vmatprep.subr.mxu0 0.0
        %819 = vmatpush1.msra.mxu0 %v751
        %820 = vmatprep.subr.mxu0 0.0
        %821 = vmatpush1.msra.mxu0 %v752
        %822 = vmatprep.subr.mxu0 0.0
        %823 = vmatpush1.msra.mxu0 %v753
        %824 = vmatprep.subr.mxu0 0.0
        %825 = vmatpush1.msra.mxu0 %v754
        %826 = vmatprep.mubr.f32.mxu0 %v715
        %827 = vmatmul.mubr.f32.gmra.mrb[0].mxu0 %v706
        %v828 = vpop.f32.mrb[0].mxu0
        %v829 = vadd.f32 %v760, %v828
        %v830 = vpop.f32.mrb[0].mxu0
        %831 = vmatprep.mubr.f32.mxu0 %v716
        %832 = vmatmul.mubr.f32.gmra.mrb[0].mxu0 %v707
        %v833 = vpop.f32.mrb[0].mxu0
        %v834 = vadd.f32 %v760, %v833
        %v835 = vpop.f32.mrb[0].mxu0
        %836 = vmatprep.mubr.f32.mxu0 %v717
        %837 = vmatmul.mubr.f32.gmra.mrb[0].mxu0 %v708
        %v838 = vpop.f32.mrb[0].mxu0
        %v839 = vadd.f32 %v760, %v838
        %v840 = vpop.f32.mrb[0].mxu0
        %841 = vmatprep.mubr.f32.mxu0 %v718
        %842 = vmatmul.mubr.f32.gmra.mrb[0].mxu0 %v709
        %v843 = vpop.f32.mrb[0].mxu0
        %v844 = vadd.f32 %v760, %v843
        %v845 = vpop.f32.mrb[0].mxu0
        %846 = vmatprep.mubr.f32.mxu0 %v719
        %847 = vmatmul.mubr.f32.gmra.mrb[0].mxu0 %v710
        %v848 = vpop.f32.mrb[0].mxu0
        %v849 = vadd.f32 %v760, %v848
        %v850 = vpop.f32.mrb[0].mxu0
        %851 = vmatprep.mubr.f32.mxu0 %v720
        %852 = vmatmul.mubr.f32.gmra.mrb[0].mxu0 %v711
        %v853 = vpop.f32.mrb[0].mxu0
        %v854 = vadd.f32 %v760, %v853
        %v855 = vpop.f32.mrb[0].mxu0
        %856 = vmatprep.mubr.f32.mxu0 %v721
        %857 = vmatmul.mubr.f32.gmra.mrb[0].mxu0 %v712
        %v858 = vpop.f32.mrb[0].mxu0
        %v859 = vadd.f32 %v760, %v858
        %v860 = vpop.f32.mrb[0].mxu0
        %861 = vmatprep.mubr.f32.mxu0 %v722
        %862 = vmatmul.mubr.f32.gmra.mrb[0].mxu0 %v713
        %v863 = vpop.f32.mrb[0].mxu0
        %v864 = vadd.f32 %v760, %v863
        %v865 = vpop.f32.mrb[0].mxu0
        %866 = vdwg.mxu0
        %s867 = scalar_lea.vmem [#allocation2], %s361
        %868 = vst [vmem:[%s867] sm:$0xff] %v829
        %869 = vst [vmem:[%s867 + $0x8] sm:$0xff] %v834
        %870 = vst [vmem:[%s867 + $0x10] sm:$0xff] %v839
        %871 = vst [vmem:[%s867 + $0x18] sm:$0xff] %v844
        %872 = vst [vmem:[%s867 + $0x20] sm:$0xff] %v849
        %873 = vst [vmem:[%s867 + $0x28] sm:$0xff] %v854
        %874 = vst [vmem:[%s867 + $0x30] sm:$0xff] %v859
        %875 = vst [vmem:[%s867 + $0x38] sm:$0xff] %v864
      $region64: #{gnn_sage_forward.1} parent=47 // pred_fallthru
        _
      %p876 = pnand %p340, %p504
      %p877 = pneg %p876
      // Predicated region
      $region65: #{gnn_sage_forward.1} parent=47 // pred_check
        _
      $region66: #{gnn_sage_forward.1} parent=47 // pred_check_branch
        %879 = sbr.rel (%p876) target = $region68
      $region67: #{gnn_sage_forward.1} parent=47 // pred_region
        %v880 = vld [vmem:[#allocation3] sm:$0xff]
        %v881 = vld [vmem:[#allocation3 + $0x8] sm:$0xff]
        %v882 = vld [vmem:[#allocation3 + $0x10] sm:$0xff]
        %v883 = vld [vmem:[#allocation3 + $0x18] sm:$0xff]
        %v884 = vld [vmem:[#allocation3 + $0x20] sm:$0xff]
        %v885 = vld [vmem:[#allocation3 + $0x28] sm:$0xff]
        %v886 = vld [vmem:[#allocation3 + $0x30] sm:$0xff]
        %v887 = vld [vmem:[#allocation3 + $0x38] sm:$0xff]
        %v888 = vld [vmem:[%s329] sm:$0xff]
        %v889 = vld [vmem:[%s329 + $0x8] sm:$0xff]
        %v890 = vld [vmem:[%s329 + $0x10] sm:$0xff]
        %v891 = vld [vmem:[%s329 + $0x18] sm:$0xff]
        %v892 = vld [vmem:[%s329 + $0x20] sm:$0xff]
        %v893 = vld [vmem:[%s329 + $0x28] sm:$0xff]
        %v894 = vld [vmem:[%s329 + $0x30] sm:$0xff]
        %v895 = vld [vmem:[%s329 + $0x38] sm:$0xff]
        %897 = vset.pattern.permute.xlu0 0
        %898 = vperm.xlu0 %897, %v888
        %v899 = vpop.permute.xlu0 %898
        %902 = vset.pattern.permute.xlu0 0
        %903 = vperm.xlu0 %902, %v889
        %v904 = vpop.permute.xlu0 %903
        %907 = vset.pattern.permute.xlu0 0
        %908 = vperm.xlu0 %907, %v890
        %v909 = vpop.permute.xlu0 %908
        %912 = vset.pattern.permute.xlu0 0
        %913 = vperm.xlu0 %912, %v891
        %v914 = vpop.permute.xlu0 %913
        %917 = vset.pattern.permute.xlu0 0
        %918 = vperm.xlu0 %917, %v892
        %v919 = vpop.permute.xlu0 %918
        %922 = vset.pattern.permute.xlu0 0
        %923 = vperm.xlu0 %922, %v893
        %v924 = vpop.permute.xlu0 %923
        %927 = vset.pattern.permute.xlu0 0
        %928 = vperm.xlu0 %927, %v894
        %v929 = vpop.permute.xlu0 %928
        %932 = vset.pattern.permute.xlu0 0
        %933 = vperm.xlu0 %932, %v895
        %v934 = vpop.permute.xlu0 %933
        %v936 = vmul.f32 %v880, %v899
        %v937 = vmul.f32 %v881, %v904
        %v938 = vmul.f32 %v882, %v909
        %v939 = vmul.f32 %v883, %v914
        %v940 = vmul.f32 %v884, %v919
        %v941 = vmul.f32 %v885, %v924
        %v942 = vmul.f32 %v886, %v929
        %v943 = vmul.f32 %v887, %v934
        %s944 = scalar_lea.vmem [#allocation2], %s361
        %v945 = vld [vmem:[%s944] sm:$0xff]
        %v946 = vld [vmem:[%s944 + $0x8] sm:$0xff]
        %v947 = vld [vmem:[%s944 + $0x10] sm:$0xff]
        %v948 = vld [vmem:[%s944 + $0x18] sm:$0xff]
        %v949 = vld [vmem:[%s944 + $0x20] sm:$0xff]
        %v950 = vld [vmem:[%s944 + $0x28] sm:$0xff]
        %v951 = vld [vmem:[%s944 + $0x30] sm:$0xff]
        %v952 = vld [vmem:[%s944 + $0x38] sm:$0xff]
        %v953 = vld [vmem:[%s5] sm:$0xff]
        %v954 = vld [vmem:[%s5 + $0x8] sm:$0xff]
        %v955 = vld [vmem:[%s5 + $0x10] sm:$0xff]
        %v956 = vld [vmem:[%s5 + $0x18] sm:$0xff]
        %v957 = vld [vmem:[%s5 + $0x20] sm:$0xff]
        %v958 = vld [vmem:[%s5 + $0x28] sm:$0xff]
        %v959 = vld [vmem:[%s5 + $0x30] sm:$0xff]
        %v960 = vld [vmem:[%s5 + $0x38] sm:$0xff]
        %v961 = vld [vmem:[%s5 + $0x40] sm:$0xff]
        %v962 = vld [vmem:[%s5 + $0x48] sm:$0xff]
        %v963 = vld [vmem:[%s5 + $0x50] sm:$0xff]
        %v964 = vld [vmem:[%s5 + $0x58] sm:$0xff]
        %v965 = vld [vmem:[%s5 + $0x60] sm:$0xff]
        %v966 = vld [vmem:[%s5 + $0x68] sm:$0xff]
        %v967 = vld [vmem:[%s5 + $0x70] sm:$0xff]
        %v968 = vld [vmem:[%s5 + $0x78] sm:$0xff]
        %v969 = vld [vmem:[%s5 + $0x80] sm:$0xff]
        %v970 = vld [vmem:[%s5 + $0x88] sm:$0xff]
        %v971 = vld [vmem:[%s5 + $0x90] sm:$0xff]
        %v972 = vld [vmem:[%s5 + $0x98] sm:$0xff]
        %v973 = vld [vmem:[%s5 + $0xa0] sm:$0xff]
        %v974 = vld [vmem:[%s5 + $0xa8] sm:$0xff]
        %v975 = vld [vmem:[%s5 + $0xb0] sm:$0xff]
        %v976 = vld [vmem:[%s5 + $0xb8] sm:$0xff]
        %v977 = vld [vmem:[%s5 + $0xc0] sm:$0xff]
        %v978 = vld [vmem:[%s5 + $0xc8] sm:$0xff]
        %v979 = vld [vmem:[%s5 + $0xd0] sm:$0xff]
        %v980 = vld [vmem:[%s5 + $0xd8] sm:$0xff]
        %v981 = vld [vmem:[%s5 + $0xe0] sm:$0xff]
        %v982 = vld [vmem:[%s5 + $0xe8] sm:$0xff]
        %v983 = vld [vmem:[%s5 + $0xf0] sm:$0xff]
        %v984 = vld [vmem:[%s5 + $0xf8] sm:$0xff]
        %v985 = vld [vmem:[%s6] sm:$0x1]
        %v987 = vlaneseq
        %v988 = vshrl.u32 %v987, 7
        %v989 = vsub.s32 0, %v988
        %v990 = vrot.slane %v985, %v989
        %992 = vmatprep.subr.mxu0 0.0
        %993 = vmatpush1.msra.mxu0 %v953
        %994 = vmatprep.subr.mxu0 0.0
        %995 = vmatpush1.msra.mxu0 %v954
        %996 = vmatprep.subr.mxu0 0.0
        %997 = vmatpush1.msra.mxu0 %v955
        %998 = vmatprep.subr.mxu0 0.0
        %999 = vmatpush1.msra.mxu0 %v956
        %1000 = vmatprep.subr.mxu0 0.0
        %1001 = vmatpush1.msra.mxu0 %v957
        %1002 = vmatprep.subr.mxu0 0.0
        %1003 = vmatpush1.msra.mxu0 %v958
        %1004 = vmatprep.subr.mxu0 0.0
        %1005 = vmatpush1.msra.mxu0 %v959
        %1006 = vmatprep.subr.mxu0 0.0
        %1007 = vmatpush1.msra.mxu0 %v960
        %1008 = vmatprep.subr.mxu0 0.0
        %1009 = vmatpush1.msra.mxu0 %v961
        %1010 = vmatprep.subr.mxu0 0.0
        %1011 = vmatpush1.msra.mxu0 %v962
        %1012 = vmatprep.subr.mxu0 0.0
        %1013 = vmatpush1.msra.mxu0 %v963
        %1014 = vmatprep.subr.mxu0 0.0
        %1015 = vmatpush1.msra.mxu0 %v964
        %1016 = vmatprep.subr.mxu0 0.0
        %1017 = vmatpush1.msra.mxu0 %v965
        %1018 = vmatprep.subr.mxu0 0.0
        %1019 = vmatpush1.msra.mxu0 %v966
        %1020 = vmatprep.subr.mxu0 0.0
        %1021 = vmatpush1.msra.mxu0 %v967
        %1022 = vmatprep.subr.mxu0 0.0
        %1023 = vmatpush1.msra.mxu0 %v968
        %1024 = vmatprep.subr.mxu0 0.0
        %1025 = vmatpush1.msra.mxu0 %v969
        %1026 = vmatprep.subr.mxu0 0.0
        %1027 = vmatpush1.msra.mxu0 %v970
        %1028 = vmatprep.subr.mxu0 0.0
        %1029 = vmatpush1.msra.mxu0 %v971
        %1030 = vmatprep.subr.mxu0 0.0
        %1031 = vmatpush1.msra.mxu0 %v972
        %1032 = vmatprep.subr.mxu0 0.0
        %1033 = vmatpush1.msra.mxu0 %v973
        %1034 = vmatprep.subr.mxu0 0.0
        %1035 = vmatpush1.msra.mxu0 %v974
        %1036 = vmatprep.subr.mxu0 0.0
        %1037 = vmatpush1.msra.mxu0 %v975
        %1038 = vmatprep.subr.mxu0 0.0
        %1039 = vmatpush1.msra.mxu0 %v976
        %1040 = vmatprep.subr.mxu0 0.0
        %1041 = vmatpush1.msra.mxu0 %v977
        %1042 = vmatprep.subr.mxu0 0.0
        %1043 = vmatpush1.msra.mxu0 %v978
        %1044 = vmatprep.subr.mxu0 0.0
        %1045 = vmatpush1.msra.mxu0 %v979
        %1046 = vmatprep.subr.mxu0 0.0
        %1047 = vmatpush1.msra.mxu0 %v980
        %1048 = vmatprep.subr.mxu0 0.0
        %1049 = vmatpush1.msra.mxu0 %v981
        %1050 = vmatprep.subr.mxu0 0.0
        %1051 = vmatpush1.msra.mxu0 %v982
        %1052 = vmatprep.subr.mxu0 0.0
        %1053 = vmatpush1.msra.mxu0 %v983
        %1054 = vmatprep.subr.mxu0 0.0
        %1055 = vmatpush1.msra.mxu0 %v984
        %1056 = vmatprep.mubr.f32.mxu0 %v945
        %1057 = vmatmul.mubr.f32.gmra.mrb[0].mxu0 %v936
        %v1058 = vpop.f32.mrb[0].mxu0
        %v1059 = vadd.f32 %v990, %v1058
        %v1060 = vpop.f32.mrb[0].mxu0
        %1061 = vmatprep.mubr.f32.mxu0 %v946
        %1062 = vmatmul.mubr.f32.gmra.mrb[0].mxu0 %v937
        %v1063 = vpop.f32.mrb[0].mxu0
        %v1064 = vadd.f32 %v990, %v1063
        %v1065 = vpop.f32.mrb[0].mxu0
        %1066 = vmatprep.mubr.f32.mxu0 %v947
        %1067 = vmatmul.mubr.f32.gmra.mrb[0].mxu0 %v938
        %v1068 = vpop.f32.mrb[0].mxu0
        %v1069 = vadd.f32 %v990, %v1068
        %v1070 = vpop.f32.mrb[0].mxu0
        %1071 = vmatprep.mubr.f32.mxu0 %v948
        %1072 = vmatmul.mubr.f32.gmra.mrb[0].mxu0 %v939
        %v1073 = vpop.f32.mrb[0].mxu0
        %v1074 = vadd.f32 %v990, %v1073
        %v1075 = vpop.f32.mrb[0].mxu0
        %1076 = vmatprep.mubr.f32.mxu0 %v949
        %1077 = vmatmul.mubr.f32.gmra.mrb[0].mxu0 %v940
        %v1078 = vpop.f32.mrb[0].mxu0
        %v1079 = vadd.f32 %v990, %v1078
        %v1080 = vpop.f32.mrb[0].mxu0
        %1081 = vmatprep.mubr.f32.mxu0 %v950
        %1082 = vmatmul.mubr.f32.gmra.mrb[0].mxu0 %v941
        %v1083 = vpop.f32.mrb[0].mxu0
        %v1084 = vadd.f32 %v990, %v1083
        %v1085 = vpop.f32.mrb[0].mxu0
        %1086 = vmatprep.mubr.f32.mxu0 %v951
        %1087 = vmatmul.mubr.f32.gmra.mrb[0].mxu0 %v942
        %v1088 = vpop.f32.mrb[0].mxu0
        %v1089 = vadd.f32 %v990, %v1088
        %v1090 = vpop.f32.mrb[0].mxu0
        %1091 = vmatprep.mubr.f32.mxu0 %v952
        %1092 = vmatmul.mubr.f32.gmra.mrb[0].mxu0 %v943
        %v1093 = vpop.f32.mrb[0].mxu0
        %v1094 = vadd.f32 %v990, %v1093
        %v1095 = vpop.f32.mrb[0].mxu0
        %1096 = vdwg.mxu0
        %1097 = vst [vmem:[%s336] sm:$0xff] %v1059
        %1098 = vst [vmem:[%s336 + $0x8] sm:$0xff] %v1064
        %1099 = vst [vmem:[%s336 + $0x10] sm:$0xff] %v1069
        %1100 = vst [vmem:[%s336 + $0x18] sm:$0xff] %v1074
        %1101 = vst [vmem:[%s336 + $0x20] sm:$0xff] %v1079
        %1102 = vst [vmem:[%s336 + $0x28] sm:$0xff] %v1084
        %1103 = vst [vmem:[%s336 + $0x30] sm:$0xff] %v1089
        %1104 = vst [vmem:[%s336 + $0x38] sm:$0xff] %v1094
      $region68: #{gnn_sage_forward.1} parent=47 // pred_fallthru
        _
      %s1105 = smul.u32 %s24, %s23
      %s1106 = smul.u32 8, %s1105
      %p1107 = scmp.lt.s32.totalorder %s1106, 15
      %s1108 = scalar_select %p1107, %s1106, 15
      %s1109 = smul.addr %s1108, 8
      %s1110 = scalar_lea.vmem %s7, %s1109
      // Predicated region
      $region69: #{gnn_sage_forward.1} parent=47 // pred_check
        %p1111 = pneg %p216
      $region70: #{gnn_sage_forward.1} parent=47 // pred_check_branch
        %1113 = sbr.rel (%p1111) target = $region72
      $region71: #{gnn_sage_forward.1} parent=47 // pred_region
        %s1114 = smul.u32 %s24, %s23
        %s1115 = smul.u32 8, %s1114
      $region72: #{gnn_sage_forward.1} parent=47 // pred_fallthru
        _
    $region48: #{gnn_sage_forward.1} parent=5 // pred_fallthru
      _
    %p1116 = scmp.le.s32.totalorder 2, %s13
    // Predicated region
    $region73: #{gnn_sage_forward.1} parent=5 // pred_check
      %p1117 = pneg %p1116
    $region74: #{gnn_sage_forward.1} parent=5 // pred_check_branch
      %1119 = sbr.rel (%p1117) target = $region76
    $region75: #{gnn_sage_forward.1} parent=5 // pred_region
      %s1120 = ssub.s32 %s13, 2
      // Predicated region
      $region77: #{gnn_sage_forward.1} parent=75 // pred_check
        %p1121 = pneg %p222
      $region78: #{gnn_sage_forward.1} parent=75 // pred_check_branch
        %1123 = sbr.rel (%p1121) target = $region80
      $region79: #{gnn_sage_forward.1} parent=75 // pred_region
        %s1124 = smul.u32 %s27, %s26
        %s1125 = smul.u32 8, %s1124
        %p1126 = scmp.lt.s32.totalorder %s1125, 15
        %s1127 = scalar_select %p1126, %s1125, 15
        %s1128 = smul.addr %s1127, 8
        %s1129 = scalar_lea.vmem %s7, %s1128
      $region80: #{gnn_sage_forward.1} parent=75 // pred_fallthru
        _
    $region76: #{gnn_sage_forward.1} parent=5 // pred_fallthru
      _
  $region6: #{gnn_sage_forward.1} parent=0 // loop_footer
    %s17 = sadd.s32 1, %s13
  $region7: #{gnn_sage_forward.1} parent=0 // loop_footer_branch
    %12 = sbr.rel target = $region3
  $region8: #{gnn_sage_forward.1} parent=0 // loop_exit
    _

</llo_original>
